<compile_context>
chip_gen: v6e
topology: v6e:2x2x1
jax: 0.10.0
libtpu: 0.0.40
codegen_flags: <defaults>
</compile_context>

<pallas_src>
import math

import numpy as np
import jax
import jax.numpy as jnp
from jax import lax
from jax.experimental import pallas as pl
from jax.experimental.pallas import tpu as pltpu


# --------------------------------------------------------------------------
# Helpers
# --------------------------------------------------------------------------
def _vmem_budget_bytes():
    """Generation-aware scoped-VMEM budget (bytes)."""
    cap = 64 * 1024 * 1024
    try:
        cap = int(pltpu.get_tpu_info().vmem_capacity_bytes)
    except Exception:
        pass
    # ~96 MiB on 128-MiB chips (v5e/v6e), ~48 MiB on 64-MiB chips (v7x).
    return max(32 * 1024 * 1024, (cap * 3) // 4)


def _round_up(v, m):
    return ((v + m - 1) // m) * m


def _itemsize(dt):
    return np.dtype(dt).itemsize


def _im2col(x, patch_size, stride):
    """Patch extraction in XLA (fallback path / reference).

    Returns (patches, (T', H', W')) with token order (n, t', h', w') and
    K order (ph, pw, C, pt) — the same ordering the fused kernel uses.
    """
    N, C, T, H, W = x.shape
    pt, ph, pw = patch_size
    st, sh, sw = stride
    Tp = (T - pt) // st + 1
    Hp = (H - ph) // sh + 1
    Wp = (W - pw) // sw + 1
    if (st, sh, sw) == (pt, ph, pw):
        # Non-overlapping patches: pure reshape + transpose (one HBM pass).
        xc = x[:, :, :Tp * pt, :Hp * ph, :Wp * pw]
        xg = xc.reshape(N, C, Tp, pt, Hp, ph, Wp, pw)
    else:
        # General strided / overlapping case (not hit by the eval default).
        it = jnp.arange(Tp)[:, None] * st + jnp.arange(pt)[None, :]
        ih = jnp.arange(Hp)[:, None] * sh + jnp.arange(ph)[None, :]
        iw = jnp.arange(Wp)[:, None] * sw + jnp.arange(pw)[None, :]
        xg = x[:, :, it]
        xg = xg[:, :, :, :, ih]
        xg = xg[:, :, :, :, :, :, iw]
    xg = xg.transpose(0, 2, 4, 6, 5, 7, 1, 3)  # (N, T', H', W', ph, pw, C, pt)
    return xg.reshape(N * Tp * Hp * Wp, C * pt * ph * pw), (Tp, Hp, Wp)


# --------------------------------------------------------------------------
# Fused im2col + matmul + bias kernel (primary path)
# --------------------------------------------------------------------------
def _make_fused_kernel(C, pt, ph, pw, Hp, Wp, compute_dtype):
    K = C * pt * ph * pw
    HWp = Hp * Wp

    def kernel(x_ref, w_ref, b_ref, o_ref):
        # x_ref: (1, C, pt, Hp*ph, Wp*pw)  one (n, t') input slab (any float dtype)
        # w_ref: (K, tn)  bf16, K ordered (ph, pw, C, pt)
        # b_ref: (1, tn)  f32
        # o_ref: (1, 1, Hp*Wp, tn)  out dtype (lane-dense over D)
        cols = []
        for dh in range(ph):
            for dw in range(pw):
                # Strided sub-window load: all tokens' (dh, dw) tap, all (c, dt).
                sl = x_ref[0, :, :,
                           pl.ds(dh, Hp, stride=ph),
                           pl.ds(dw, Wp, stride=pw)]            # (C, pt, Hp, Wp)
                cols.append(sl.astype(compute_dtype).reshape(C * pt, HWp))
        p_t = jnp.concatenate(cols, axis=0)                      # (K, HWp)
        patches = p_t.T                                          # (HWp, K)
        acc = jnp.dot(patches, w_ref[...],
                      preferred_element_type=jnp.float32)        # (HWp, tn)
        acc = acc + b_ref[...]
        o_ref[0, 0] = acc.astype(o_ref.dtype)

    return kernel


def _fused_pick_tn(C, pt, H, W, Hp, Wp, K, D, in_bytes, out_bytes, budget):
    """Largest D tile (full D, else multiples of 128) that fits the budget.
    Returns None if the fused kernel is infeasible for this shape."""
    HWp = Hp * Wp
    x_block = 2 * C * pt * H * W * in_bytes       # double-buffered input slab
    fixed = x_block + 2 * D * 4 + (4 << 20)       # bias + slop for Mosaic temps
    cands = [D]
    t = (D // 128) * 128
    while t >= 128:
        if t < D:
            cands.append(t)
        t -= 128
    for tn in cands:
        need = (fixed
                + 2 * K * tn * 2                  # double-buffered weight tile
                + 2 * HWp * tn * out_bytes        # double-buffered output tile
                + 2 * K * HWp * 2                 # patchesT + transposed copy
                + HWp * tn * 4)                   # f32 accumulator value
        if need <= budget:
            return tn
    return None


def _fused_patch_embed(x, w_kd, bias2d, *, patch_size, out_dtype, compute_dtype, tn):
    N, C, T, H, W = x.shape
    pt, ph, pw = patch_size
    Tp, Hp, Wp = T // pt, H // ph, W // pw
    K, D = w_kd.shape
    HWp = Hp * Wp

    kernel = _make_fused_kernel(C, pt, ph, pw, Hp, Wp, compute_dtype)
    grid = (N, Tp, pl.cdiv(D, tn))

    cost = pl.CostEstimate(
        flops=2 * N * Tp * HWp * K * D,
        transcendentals=0,
        bytes_accessed=(N * C * T * H * W * _itemsize(x.dtype)
                        + K * D * 2
                        + N * Tp * HWp * D * _itemsize(out_dtype)),
    )

    return pl.pallas_call(
        kernel,
        out_shape=jax.ShapeDtypeStruct((N, Tp, HWp, D), out_dtype),
        grid_spec=pltpu.PrefetchScalarGridSpec(
            num_scalar_prefetch=0,
            grid=grid,
            in_specs=[
                # One (n, t') slab; block index does not change over the inner
                # D axis, so it is DMA'd once per slab.
                pl.BlockSpec((1, C, pt, H, W), lambda n, t, j: (n, 0, t, 0, 0)),
                pl.BlockSpec((K, tn), lambda n, t, j: (0, j)),
                pl.BlockSpec((1, tn), lambda n, t, j: (0, j)),
            ],
            out_specs=pl.BlockSpec((1, 1, HWp, tn), lambda n, t, j: (n, t, 0, j)),
        ),
        compiler_params=pltpu.CompilerParams(
            # N/T' split across TensorCores (megacore); D axis iterated.
            dimension_semantics=("parallel", "parallel", "arbitrary"),
            vmem_limit_bytes=_vmem_budget_bytes(),
        ),
        cost_estimate=cost,
    )(x, w_kd, bias2d)


# --------------------------------------------------------------------------
# Two-pass fallback: XLA im2col + Pallas matmul (known-good path)
# --------------------------------------------------------------------------
def _matmul_kernel(p_ref, w_ref, b_ref, o_ref):
    acc = jnp.dot(p_ref[...], w_ref[...], preferred_element_type=jnp.float32)
    o_ref[...] = (acc + b_ref[...]).astype(o_ref.dtype)


def _choose_matmul_tiles(M, K, D, in_bytes, out_bytes, budget):
    tn = D if D <= 1024 else 512
    tm = 128
    for cand in (2048, 1024, 512, 256, 128):
        need = (2 * cand * K * in_bytes          # patches tile (double buffered)
                + 2 * K * tn * in_bytes          # weight tile
                + 2 * tn * 4                     # bias
                + 2 * cand * tn * out_bytes      # output tile
                + cand * tn * 4                  # f32 accumulator value
                + (4 << 20))
        if need <= budget:
            tm = cand
            break
    # Keep enough grid steps for both v7x TensorCores + pipeline overlap.
    tm = min(tm, max(128, _round_up(pl.cdiv(M, 8), 128)))
    tm = min(tm, _round_up(M, 128))
    return tm, tn


def _matmul_patch_embed(patches, w_kd, bias2d, *, out_dtype, budget):
    M, K = patches.shape
    K2, D = w_kd.shape
    assert K == K2
    in_bytes = _itemsize(patches.dtype)
    out_bytes = _itemsize(out_dtype)
    tm, tn = _choose_matmul_tiles(M, K, D, in_bytes, out_bytes, budget)
    grid = (pl.cdiv(M, tm), pl.cdiv(D, tn))
    cost = pl.CostEstimate(
        flops=2 * M * K * D,
        transcendentals=0,
        bytes_accessed=(M * K * in_bytes + K * D * in_bytes
                        + M * D * out_bytes + D * 4),
    )
    # TODO(synk): K is kept un-tiled here; add a 3rd "arbitrary" grid axis with
    # an f32 accumulator for configs where a full-K block does not fit VMEM.
    return pl.pallas_call(
        _matmul_kernel,
        out_shape=jax.ShapeDtypeStruct((M, D), out_dtype),
        grid_spec=pltpu.PrefetchScalarGridSpec(
            num_scalar_prefetch=0,
            grid=grid,
            in_specs=[
                pl.BlockSpec((tm, K), lambda i, j: (i, 0)),
                pl.BlockSpec((K, tn), lambda i, j: (0, j)),
                pl.BlockSpec((1, tn), lambda i, j: (0, j)),
            ],
            out_specs=pl.BlockSpec((tm, tn), lambda i, j: (i, j)),
        ),
        compiler_params=pltpu.CompilerParams(
            dimension_semantics=("parallel", "parallel"),
            vmem_limit_bytes=budget,
        ),
        cost_estimate=cost,
    )(patches, w_kd, bias2d)


# --------------------------------------------------------------------------
# Module wrapper
# --------------------------------------------------------------------------
class FlexiPatchEmbed3dPallas:
    """JAX/Pallas port of FlexiPatchEmbed3d (eval-mode forward, norm_layer=None).

    Output dtype defaults to bf16 (set out_dtype=jnp.float32 for strict
    f32 parity).  Output layout defaults to NCDHW like PyTorch (the permute is
    done in bf16); pass channels_last_output=True to skip it entirely.
    """

    def __init__(self, input_size, patch_size, stride, channels, d_embed, key,
                 bias=True, compute_dtype=jnp.bfloat16, out_dtype=jnp.bfloat16):
        assert len(input_size) == len(patch_size) == len(stride) == 3
        self.input_size = tuple(int(v) for v in input_size)
        self.patch_size = tuple(int(v) for v in patch_size)
        self.stride = tuple(int(v) for v in stride)
        self.ratio = tuple(float(s / p) for s, p in zip(self.stride, self.patch_size))
        self.channels = int(channels)
        self.d_embed = int(d_embed)
        self.compute_dtype = compute_dtype
        self.out_dtype = out_dtype

        pt, ph, pw = self.patch_size
        K = self.channels * pt * ph * pw
        self._K = K
        bound = 1.0 / math.sqrt(K)
        wkey, bkey = jax.random.split(key)
        # Same parameter shapes/init as nn.Conv3d: weight (D, C, pt, ph, pw), bias (D,)
        self.weight = jax.random.uniform(
            wkey, (self.d_embed, self.channels, pt, ph, pw), jnp.float32, -bound, bound)
        self.bias = (jax.random.uniform(bkey, (self.d_embed,), jnp.float32, -bound, bound)
                     if bias else jnp.zeros((self.d_embed,), jnp.float32))
        # Flattened weight with K ordered (ph, pw, C, pt) — matches the in-kernel
        # patch assembly — in the MXU compute dtype (done once at init).
        self._w_kd = jnp.asarray(
            self.weight.transpose(3, 4, 1, 2, 0).reshape(K, self.d_embed),
            dtype=compute_dtype)
        self._bias2d = self.bias.reshape(1, self.d_embed).astype(jnp.float32)

        # One-time capability/correctness probe: prefer the fused-im2col kernel;
        # fall back to the two-pass path if it does not lower / validate here.
        self._use_fused = (self.stride == self.patch_size) and self._probe_fused()

    # -- fused-path runner -------------------------------------------------
    def _run_fused(self, x, tn):
        N, C, T, H, W = x.shape
        pt, ph, pw = self.patch_size
        Tp, Hp, Wp = T // pt, H // ph, W // pw
        if (H, W) != (Hp * ph, Wp * pw):
            x = x[:, :, :, :Hp * ph, :Wp * pw]   # conv discards the remainder
        out = _fused_patch_embed(
            x, self._w_kd, self._bias2d, patch_size=self.patch_size,
            out_dtype=self.out_dtype, compute_dtype=self.compute_dtype, tn=tn)
        return out.reshape(N, Tp, Hp, Wp, self.d_embed)

    def _probe_fused(self):
        try:
            T, H, W = self.input_size
            pt, ph, pw = self.patch_size
            if T < pt or H < ph or W < pw:
                return False
            Tp, Hp, Wp = T // pt, H // ph, W // pw
            tn = _fused_pick_tn(self.channels, pt, Hp * ph, Wp * pw, Hp, Wp,
                                self._K, self.d_embed, 4,
                                _itemsize(self.out_dtype), _vmem_budget_bytes())
            if tn is None:
                return False
            x = jax.random.normal(jax.random.PRNGKey(1234),
                                  (1, self.channels, T, H, W), jnp.float32)
            got = jax.block_until_ready(self._run_fused(x, tn)).astype(jnp.float32)
            patches, _ = _im2col(x.astype(self.compute_dtype),
                                 self.patch_size, self.patch_size)
            ref = (patches.astype(jnp.float32) @ self._w_kd.astype(jnp.float32)
                   + self._bias2d)
            ref = ref.reshape(got.shape)
            return bool(jnp.allclose(got, ref, atol=5e-2, rtol=5e-2))
        except Exception:
            return False

    # -- forward -------------------------------------------------------------
    def __call__(self, x, patch_size=None, return_patch_size=False,
                 channels_last_output=False):
        # x: (N, C, T, H, W) — NCDHW, like the PyTorch module.
        if patch_size is None:
            patch_size = self.patch_size              # eval-mode default path
        patch_size = tuple(int(p) for p in patch_size)
        assert patch_size == self.patch_size, \
            "only the default (non-resampled) patch size is supported"
        stride = tuple(int(p * r) for p, r in zip(patch_size, self.ratio))

        N, C, T, H, W = x.shape
        pt, ph, pw = patch_size
        st, sh, sw = stride
        Tp = (T - pt) // st + 1
        Hp = (H - ph) // sh + 1
        Wp = (W - pw) // sw + 1
        D = self.d_embed

        use_fused = self._use_fused and stride == patch_size
        tn = None
        if use_fused:
            tn = _fused_pick_tn(C, pt, Hp * ph, Wp * pw, Hp, Wp, self._K, D,
                                _itemsize(x.dtype), _itemsize(self.out_dtype),
                                _vmem_budget_bytes())
            use_fused = tn is not None

        if use_fused:
            out = self._run_fused(x, tn)               # (N, T', H', W', D)
        else:
            # Fallback: XLA im2col (one extra HBM pass, bf16) + Pallas matmul.
            patches, _ = _im2col(x.astype(self.compute_dtype), patch_size, stride)
            out = _matmul_patch_embed(
                patches, self._w_kd, self._bias2d, out_dtype=self.out_dtype,
                budget=_vmem_budget_bytes()).reshape(N, Tp, Hp, Wp, D)

        # norm_layer=None -> Identity.
        if not channels_last_output:
            # PyTorch parity layout (N, D, T', H', W'); permute done in bf16.
            out = out.transpose(0, 4, 1, 2, 3)
        if return_patch_size:
            return out, patch_size
        return out


# --------------------------------------------------------------------------
# main
# --------------------------------------------------------------------------
if __name__ == "__main__":
    key = jax.random.PRNGKey(0)
    k_param, k_x = jax.random.split(key)

    # Small shapes: batch=2, channels=4, input_size=(8,16,16),
    # patch=stride=(2,4,4), d_embed=128 -> T'=4, H'=W'=4, K=128, M=128.
    input_size = (8, 16, 16)
    patch_size = (2, 4, 4)
    stride = (2, 4, 4)
    channels = 4
    d_embed = 128
    batch = 2

    module = FlexiPatchEmbed3dPallas(input_size, patch_size, stride,
                                     channels, d_embed, key=k_param)

    x = jax.random.normal(k_x, (batch, channels) + input_size, jnp.float32)

    out = module(x)                      # (N, D, T', H', W'), bf16
    out = jax.block_until_ready(out)

    # Reference: XLA conv3d on the SAME bf16-rounded inputs (the kernel computes
    # bf16 x bf16 products with f32 accumulation, then rounds to bf16).
    xq = x.astype(jnp.bfloat16).astype(jnp.float32)
    wq = module.weight.astype(jnp.bfloat16).astype(jnp.float32)
    ref = lax.conv_general_dilated(
        xq, wq, window_strides=stride, padding="VALID",
        dimension_numbers=("NCDHW", "OIDHW", "NCDHW"),
        precision=lax.Precision.HIGHEST)
    ref = ref + module.bias.reshape(1, d_embed, 1, 1, 1)

    outf = out.astype(jnp.float32)
    assert out.shape == ref.shape, (out.shape, ref.shape)
    max_err = float(jnp.max(jnp.abs(outf - ref)))
    assert jnp.allclose(outf, ref, atol=2e-2, rtol=2e-2), max_err

    print("KERNEL_OK")
</pallas_src>

<mosaic_0001>
module attributes {stable_mosaic.version = 11 : i64} {
  func.func @kernel(%arg0: i32, %arg1: i32, %arg2: i32, %arg3: memref<1x4x2x16x16xf32, #tpu.memory_space<vmem>>, %arg4: memref<128x128xbf16, #tpu.memory_space<vmem>>, %arg5: memref<1x128xf32, #tpu.memory_space<vmem>>, %arg6: memref<1x1x16x128xbf16, #tpu.memory_space<vmem>>) attributes {dimension_semantics = [#tpu.dimension_semantics<parallel>, #tpu.dimension_semantics<parallel>, #tpu.dimension_semantics<arbitrary>], iteration_bounds = array<i64: 1, 4, 1>, scalar_prefetch = 0 : i64, scratch_operands = 0 : i64, tpu.core_type = #tpu.core_type<tc>, window_params = [{transform_indices = @transform_0, window_bounds = array<i64: 1, 4, 2, 16, 16>}, {transform_indices = @transform_1, window_bounds = array<i64: 128, 128>}, {transform_indices = @transform_2, window_bounds = array<i64: 1, 128>}, {transform_indices = @transform_3, window_bounds = array<i64: 1, 1, 16, 128>}]} {
    %c0 = arith.constant 0 : index
    %c0_0 = arith.constant 0 : index
    %c0_1 = arith.constant 0 : index
    %c0_2 = arith.constant 0 : index
    %c0_3 = arith.constant 0 : index
    %0 = tpu.strided_load %arg3[%c0, %c0_0, %c0_1, %c0_2, %c0_3] {strides = array<i32: 1, 1, 1, 4, 4>} : memref<1x4x2x16x16xf32, #tpu.memory_space<vmem>>, vector<1x4x2x4x4xf32>
    %1 = vector.shape_cast %0 : vector<1x4x2x4x4xf32> to vector<4x2x4x4xf32>
    %2 = arith.truncf %1 : vector<4x2x4x4xf32> to vector<4x2x4x4xbf16>
    %3 = vector.shape_cast %2 : vector<4x2x4x4xbf16> to vector<8x16xbf16>
    %c0_4 = arith.constant 0 : index
    %c0_5 = arith.constant 0 : index
    %c0_6 = arith.constant 0 : index
    %c0_7 = arith.constant 0 : index
    %c1 = arith.constant 1 : index
    %4 = tpu.strided_load %arg3[%c0_4, %c0_5, %c0_6, %c0_7, %c1] {strides = array<i32: 1, 1, 1, 4, 4>} : memref<1x4x2x16x16xf32, #tpu.memory_space<vmem>>, vector<1x4x2x4x4xf32>
    %5 = vector.shape_cast %4 : vector<1x4x2x4x4xf32> to vector<4x2x4x4xf32>
    %6 = arith.truncf %5 : vector<4x2x4x4xf32> to vector<4x2x4x4xbf16>
    %7 = vector.shape_cast %6 : vector<4x2x4x4xbf16> to vector<8x16xbf16>
    %c0_8 = arith.constant 0 : index
    %c0_9 = arith.constant 0 : index
    %c0_10 = arith.constant 0 : index
    %c0_11 = arith.constant 0 : index
    %c2 = arith.constant 2 : index
    %8 = tpu.strided_load %arg3[%c0_8, %c0_9, %c0_10, %c0_11, %c2] {strides = array<i32: 1, 1, 1, 4, 4>} : memref<1x4x2x16x16xf32, #tpu.memory_space<vmem>>, vector<1x4x2x4x4xf32>
    %9 = vector.shape_cast %8 : vector<1x4x2x4x4xf32> to vector<4x2x4x4xf32>
    %10 = arith.truncf %9 : vector<4x2x4x4xf32> to vector<4x2x4x4xbf16>
    %11 = vector.shape_cast %10 : vector<4x2x4x4xbf16> to vector<8x16xbf16>
    %c0_12 = arith.constant 0 : index
    %c0_13 = arith.constant 0 : index
    %c0_14 = arith.constant 0 : index
    %c0_15 = arith.constant 0 : index
    %c3 = arith.constant 3 : index
    %12 = tpu.strided_load %arg3[%c0_12, %c0_13, %c0_14, %c0_15, %c3] {strides = array<i32: 1, 1, 1, 4, 4>} : memref<1x4x2x16x16xf32, #tpu.memory_space<vmem>>, vector<1x4x2x4x4xf32>
    %13 = vector.shape_cast %12 : vector<1x4x2x4x4xf32> to vector<4x2x4x4xf32>
    %14 = arith.truncf %13 : vector<4x2x4x4xf32> to vector<4x2x4x4xbf16>
    %15 = vector.shape_cast %14 : vector<4x2x4x4xbf16> to vector<8x16xbf16>
    %c0_16 = arith.constant 0 : index
    %c0_17 = arith.constant 0 : index
    %c0_18 = arith.constant 0 : index
    %c1_19 = arith.constant 1 : index
    %c0_20 = arith.constant 0 : index
    %16 = tpu.strided_load %arg3[%c0_16, %c0_17, %c0_18, %c1_19, %c0_20] {strides = array<i32: 1, 1, 1, 4, 4>} : memref<1x4x2x16x16xf32, #tpu.memory_space<vmem>>, vector<1x4x2x4x4xf32>
    %17 = vector.shape_cast %16 : vector<1x4x2x4x4xf32> to vector<4x2x4x4xf32>
    %18 = arith.truncf %17 : vector<4x2x4x4xf32> to vector<4x2x4x4xbf16>
    %19 = vector.shape_cast %18 : vector<4x2x4x4xbf16> to vector<8x16xbf16>
    %c0_21 = arith.constant 0 : index
    %c0_22 = arith.constant 0 : index
    %c0_23 = arith.constant 0 : index
    %c1_24 = arith.constant 1 : index
    %c1_25 = arith.constant 1 : index
    %20 = tpu.strided_load %arg3[%c0_21, %c0_22, %c0_23, %c1_24, %c1_25] {strides = array<i32: 1, 1, 1, 4, 4>} : memref<1x4x2x16x16xf32, #tpu.memory_space<vmem>>, vector<1x4x2x4x4xf32>
    %21 = vector.shape_cast %20 : vector<1x4x2x4x4xf32> to vector<4x2x4x4xf32>
    %22 = arith.truncf %21 : vector<4x2x4x4xf32> to vector<4x2x4x4xbf16>
    %23 = vector.shape_cast %22 : vector<4x2x4x4xbf16> to vector<8x16xbf16>
    %c0_26 = arith.constant 0 : index
    %c0_27 = arith.constant 0 : index
    %c0_28 = arith.constant 0 : index
    %c1_29 = arith.constant 1 : index
    %c2_30 = arith.constant 2 : index
    %24 = tpu.strided_load %arg3[%c0_26, %c0_27, %c0_28, %c1_29, %c2_30] {strides = array<i32: 1, 1, 1, 4, 4>} : memref<1x4x2x16x16xf32, #tpu.memory_space<vmem>>, vector<1x4x2x4x4xf32>
    %25 = vector.shape_cast %24 : vector<1x4x2x4x4xf32> to vector<4x2x4x4xf32>
    %26 = arith.truncf %25 : vector<4x2x4x4xf32> to vector<4x2x4x4xbf16>
    %27 = vector.shape_cast %26 : vector<4x2x4x4xbf16> to vector<8x16xbf16>
    %c0_31 = arith.constant 0 : index
    %c0_32 = arith.constant 0 : index
    %c0_33 = arith.constant 0 : index
    %c1_34 = arith.constant 1 : index
    %c3_35 = arith.constant 3 : index
    %28 = tpu.strided_load %arg3[%c0_31, %c0_32, %c0_33, %c1_34, %c3_35] {strides = array<i32: 1, 1, 1, 4, 4>} : memref<1x4x2x16x16xf32, #tpu.memory_space<vmem>>, vector<1x4x2x4x4xf32>
    %29 = vector.shape_cast %28 : vector<1x4x2x4x4xf32> to vector<4x2x4x4xf32>
    %30 = arith.truncf %29 : vector<4x2x4x4xf32> to vector<4x2x4x4xbf16>
    %31 = vector.shape_cast %30 : vector<4x2x4x4xbf16> to vector<8x16xbf16>
    %c0_36 = arith.constant 0 : index
    %c0_37 = arith.constant 0 : index
    %c0_38 = arith.constant 0 : index
    %c2_39 = arith.constant 2 : index
    %c0_40 = arith.constant 0 : index
    %32 = tpu.strided_load %arg3[%c0_36, %c0_37, %c0_38, %c2_39, %c0_40] {strides = array<i32: 1, 1, 1, 4, 4>} : memref<1x4x2x16x16xf32, #tpu.memory_space<vmem>>, vector<1x4x2x4x4xf32>
    %33 = vector.shape_cast %32 : vector<1x4x2x4x4xf32> to vector<4x2x4x4xf32>
    %34 = arith.truncf %33 : vector<4x2x4x4xf32> to vector<4x2x4x4xbf16>
    %35 = vector.shape_cast %34 : vector<4x2x4x4xbf16> to vector<8x16xbf16>
    %c0_41 = arith.constant 0 : index
    %c0_42 = arith.constant 0 : index
    %c0_43 = arith.constant 0 : index
    %c2_44 = arith.constant 2 : index
    %c1_45 = arith.constant 1 : index
    %36 = tpu.strided_load %arg3[%c0_41, %c0_42, %c0_43, %c2_44, %c1_45] {strides = array<i32: 1, 1, 1, 4, 4>} : memref<1x4x2x16x16xf32, #tpu.memory_space<vmem>>, vector<1x4x2x4x4xf32>
    %37 = vector.shape_cast %36 : vector<1x4x2x4x4xf32> to vector<4x2x4x4xf32>
    %38 = arith.truncf %37 : vector<4x2x4x4xf32> to vector<4x2x4x4xbf16>
    %39 = vector.shape_cast %38 : vector<4x2x4x4xbf16> to vector<8x16xbf16>
    %c0_46 = arith.constant 0 : index
    %c0_47 = arith.constant 0 : index
    %c0_48 = arith.constant 0 : index
    %c2_49 = arith.constant 2 : index
    %c2_50 = arith.constant 2 : index
    %40 = tpu.strided_load %arg3[%c0_46, %c0_47, %c0_48, %c2_49, %c2_50] {strides = array<i32: 1, 1, 1, 4, 4>} : memref<1x4x2x16x16xf32, #tpu.memory_space<vmem>>, vector<1x4x2x4x4xf32>
    %41 = vector.shape_cast %40 : vector<1x4x2x4x4xf32> to vector<4x2x4x4xf32>
    %42 = arith.truncf %41 : vector<4x2x4x4xf32> to vector<4x2x4x4xbf16>
    %43 = vector.shape_cast %42 : vector<4x2x4x4xbf16> to vector<8x16xbf16>
    %c0_51 = arith.constant 0 : index
    %c0_52 = arith.constant 0 : index
    %c0_53 = arith.constant 0 : index
    %c2_54 = arith.constant 2 : index
    %c3_55 = arith.constant 3 : index
    %44 = tpu.strided_load %arg3[%c0_51, %c0_52, %c0_53, %c2_54, %c3_55] {strides = array<i32: 1, 1, 1, 4, 4>} : memref<1x4x2x16x16xf32, #tpu.memory_space<vmem>>, vector<1x4x2x4x4xf32>
    %45 = vector.shape_cast %44 : vector<1x4x2x4x4xf32> to vector<4x2x4x4xf32>
    %46 = arith.truncf %45 : vector<4x2x4x4xf32> to vector<4x2x4x4xbf16>
    %47 = vector.shape_cast %46 : vector<4x2x4x4xbf16> to vector<8x16xbf16>
    %c0_56 = arith.constant 0 : index
    %c0_57 = arith.constant 0 : index
    %c0_58 = arith.constant 0 : index
    %c3_59 = arith.constant 3 : index
    %c0_60 = arith.constant 0 : index
    %48 = tpu.strided_load %arg3[%c0_56, %c0_57, %c0_58, %c3_59, %c0_60] {strides = array<i32: 1, 1, 1, 4, 4>} : memref<1x4x2x16x16xf32, #tpu.memory_space<vmem>>, vector<1x4x2x4x4xf32>
    %49 = vector.shape_cast %48 : vector<1x4x2x4x4xf32> to vector<4x2x4x4xf32>
    %50 = arith.truncf %49 : vector<4x2x4x4xf32> to vector<4x2x4x4xbf16>
    %51 = vector.shape_cast %50 : vector<4x2x4x4xbf16> to vector<8x16xbf16>
    %c0_61 = arith.constant 0 : index
    %c0_62 = arith.constant 0 : index
    %c0_63 = arith.constant 0 : index
    %c3_64 = arith.constant 3 : index
    %c1_65 = arith.constant 1 : index
    %52 = tpu.strided_load %arg3[%c0_61, %c0_62, %c0_63, %c3_64, %c1_65] {strides = array<i32: 1, 1, 1, 4, 4>} : memref<1x4x2x16x16xf32, #tpu.memory_space<vmem>>, vector<1x4x2x4x4xf32>
    %53 = vector.shape_cast %52 : vector<1x4x2x4x4xf32> to vector<4x2x4x4xf32>
    %54 = arith.truncf %53 : vector<4x2x4x4xf32> to vector<4x2x4x4xbf16>
    %55 = vector.shape_cast %54 : vector<4x2x4x4xbf16> to vector<8x16xbf16>
    %c0_66 = arith.constant 0 : index
    %c0_67 = arith.constant 0 : index
    %c0_68 = arith.constant 0 : index
    %c3_69 = arith.constant 3 : index
    %c2_70 = arith.constant 2 : index
    %56 = tpu.strided_load %arg3[%c0_66, %c0_67, %c0_68, %c3_69, %c2_70] {strides = array<i32: 1, 1, 1, 4, 4>} : memref<1x4x2x16x16xf32, #tpu.memory_space<vmem>>, vector<1x4x2x4x4xf32>
    %57 = vector.shape_cast %56 : vector<1x4x2x4x4xf32> to vector<4x2x4x4xf32>
    %58 = arith.truncf %57 : vector<4x2x4x4xf32> to vector<4x2x4x4xbf16>
    %59 = vector.shape_cast %58 : vector<4x2x4x4xbf16> to vector<8x16xbf16>
    %c0_71 = arith.constant 0 : index
    %c0_72 = arith.constant 0 : index
    %c0_73 = arith.constant 0 : index
    %c3_74 = arith.constant 3 : index
    %c3_75 = arith.constant 3 : index
    %60 = tpu.strided_load %arg3[%c0_71, %c0_72, %c0_73, %c3_74, %c3_75] {strides = array<i32: 1, 1, 1, 4, 4>} : memref<1x4x2x16x16xf32, #tpu.memory_space<vmem>>, vector<1x4x2x4x4xf32>
    %61 = vector.shape_cast %60 : vector<1x4x2x4x4xf32> to vector<4x2x4x4xf32>
    %62 = arith.truncf %61 : vector<4x2x4x4xf32> to vector<4x2x4x4xbf16>
    %63 = vector.shape_cast %62 : vector<4x2x4x4xbf16> to vector<8x16xbf16>
    %64 = tpu.concatenate %3, %7, %11, %15, %19, %23, %27, %31, %35, %39, %43, %47, %51, %55, %59, %63 in 0 : vector<8x16xbf16>, vector<8x16xbf16>, vector<8x16xbf16>, vector<8x16xbf16>, vector<8x16xbf16>, vector<8x16xbf16>, vector<8x16xbf16>, vector<8x16xbf16>, vector<8x16xbf16>, vector<8x16xbf16>, vector<8x16xbf16>, vector<8x16xbf16>, vector<8x16xbf16>, vector<8x16xbf16>, vector<8x16xbf16>, vector<8x16xbf16> -> vector<128x16xbf16>
    %65 = tpu.transpose %64, [1, 0] : vector<128x16xbf16> -> vector<16x128xbf16>
    %c0_76 = arith.constant 0 : index
    %c0_77 = arith.constant 0 : index
    %66 = vector.load %arg4[%c0_76, %c0_77] : memref<128x128xbf16, #tpu.memory_space<vmem>>, vector<128x128xbf16>
    %cst = arith.constant dense<0.000000e+00> : vector<16x128xf32>
    %67 = tpu.matmul %65, %66, %cst {dimension_numbers = #tpu.dot_dimension_numbers<[1], [0], [0], [1], [0, 0, 1, 1], [], []>} : vector<16x128xbf16>, vector<128x128xbf16>, vector<16x128xf32> -> vector<16x128xf32>
    %c0_78 = arith.constant 0 : index
    %c0_79 = arith.constant 0 : index
    %68 = vector.load %arg5[%c0_78, %c0_79] : memref<1x128xf32, #tpu.memory_space<vmem>>, vector<1x128xf32>
    %69 = vector.broadcast %68 : vector<1x128xf32> to vector<16x128xf32>
    %70 = arith.addf %67, %69 : vector<16x128xf32>
    %71 = arith.truncf %70 : vector<16x128xf32> to vector<16x128xbf16>
    %c0_80 = arith.constant 0 : index
    %c0_81 = arith.constant 0 : index
    %c0_82 = arith.constant 0 : index
    %c0_83 = arith.constant 0 : index
    %72 = vector.load %arg6[%c0_80, %c0_81, %c0_82, %c0_83] : memref<1x1x16x128xbf16, #tpu.memory_space<vmem>>, vector<1x1x16x128xbf16>
    %73 = vector.shape_cast %72 : vector<1x1x16x128xbf16> to vector<16x128xbf16>
    %74 = vector.shape_cast %71 : vector<16x128xbf16> to vector<1x1x16x128xbf16>
    tpu.vector_store %arg6[%c0_80, %c0_81, %c0_82, %c0_83], %74 {strides = array<i32>} : memref<1x1x16x128xbf16, #tpu.memory_space<vmem>>, vector<1x1x16x128xbf16>,
    return
  }
  func.func @transform_0(%arg0: i32, %arg1: i32, %arg2: i32) -> (i32, i32, i32, i32, i32) {
    %c0_i32 = arith.constant 0 : i32
    %c0_i32_0 = arith.constant 0 : i32
    %c0_i32_1 = arith.constant 0 : i32
    %c0_i32_2 = arith.constant 0 : i32
    return %arg0, %c0_i32, %arg1, %c0_i32_0, %c0_i32_1 : i32, i32, i32, i32, i32
  }
  func.func @transform_1(%arg0: i32, %arg1: i32, %arg2: i32) -> (i32, i32) {
    %c0_i32 = arith.constant 0 : i32
    %c0_i32_0 = arith.constant 0 : i32
    return %c0_i32, %arg2 : i32, i32
  }
  func.func @transform_2(%arg0: i32, %arg1: i32, %arg2: i32) -> (i32, i32) {
    %c0_i32 = arith.constant 0 : i32
    %c0_i32_0 = arith.constant 0 : i32
    return %c0_i32, %arg2 : i32, i32
  }
  func.func @transform_3(%arg0: i32, %arg1: i32, %arg2: i32) -> (i32, i32, i32, i32) {
    %c0_i32 = arith.constant 0 : i32
    %c0_i32_0 = arith.constant 0 : i32
    return %arg0, %arg1, %c0_i32, %arg2 : i32, i32, i32, i32
  }
}

module attributes {stable_mosaic.version = 11 : i64} {
  func.func @_matmul_kernel(%arg0: i32, %arg1: i32, %arg2: memref<128x128xbf16, #tpu.memory_space<vmem>>, %arg3: memref<128x128xbf16, #tpu.memory_space<vmem>>, %arg4: memref<1x128xf32, #tpu.memory_space<vmem>>, %arg5: memref<128x128xbf16, #tpu.memory_space<vmem>>) attributes {dimension_semantics = [#tpu.dimension_semantics<parallel>, #tpu.dimension_semantics<parallel>], iteration_bounds = array<i64: 1, 1>, scalar_prefetch = 0 : i64, scratch_operands = 0 : i64, tpu.core_type = #tpu.core_type<tc>, window_params = [{transform_indices = @transform_0, window_bounds = array<i64: 128, 128>}, {transform_indices = @transform_1, window_bounds = array<i64: 128, 128>}, {transform_indices = @transform_2, window_bounds = array<i64: 1, 128>}, {transform_indices = @transform_3, window_bounds = array<i64: 128, 128>}]} {
    %c0 = arith.constant 0 : index
    %c0_0 = arith.constant 0 : index
    %0 = vector.load %arg2[%c0, %c0_0] : memref<128x128xbf16, #tpu.memory_space<vmem>>, vector<128x128xbf16>
    %c0_1 = arith.constant 0 : index
    %c0_2 = arith.constant 0 : index
    %1 = vector.load %arg3[%c0_1, %c0_2] : memref<128x128xbf16, #tpu.memory_space<vmem>>, vector<128x128xbf16>
    %cst = arith.constant dense<0.000000e+00> : vector<128x128xf32>
    %2 = tpu.matmul %0, %1, %cst {dimension_numbers = #tpu.dot_dimension_numbers<[1], [0], [0], [1], [0, 0, 1, 1], [], []>} : vector<128x128xbf16>, vector<128x128xbf16>, vector<128x128xf32> -> vector<128x128xf32>
    %c0_3 = arith.constant 0 : index
    %c0_4 = arith.constant 0 : index
    %3 = vector.load %arg4[%c0_3, %c0_4] : memref<1x128xf32, #tpu.memory_space<vmem>>, vector<1x128xf32>
    %4 = vector.broadcast %3 : vector<1x128xf32> to vector<128x128xf32>
    %5 = arith.addf %2, %4 : vector<128x128xf32>
    %6 = arith.truncf %5 : vector<128x128xf32> to vector<128x128xbf16>
    %c0_5 = arith.constant 0 : index
    %c0_6 = arith.constant 0 : index
    %7 = vector.load %arg5[%c0_5, %c0_6] : memref<128x128xbf16, #tpu.memory_space<vmem>>, vector<128x128xbf16>
    tpu.vector_store %arg5[%c0_5, %c0_6], %6 {strides = array<i32>} : memref<128x128xbf16, #tpu.memory_space<vmem>>, vector<128x128xbf16>,
    return
  }
  func.func @transform_0(%arg0: i32, %arg1: i32) -> (i32, i32) {
    %c0_i32 = arith.constant 0 : i32
    %c0_i32_0 = arith.constant 0 : i32
    return %arg0, %c0_i32 : i32, i32
  }
  func.func @transform_1(%arg0: i32, %arg1: i32) -> (i32, i32) {
    %c0_i32 = arith.constant 0 : i32
    %c0_i32_0 = arith.constant 0 : i32
    return %c0_i32, %arg1 : i32, i32
  }
  func.func @transform_2(%arg0: i32, %arg1: i32) -> (i32, i32) {
    %c0_i32 = arith.constant 0 : i32
    %c0_i32_0 = arith.constant 0 : i32
    return %c0_i32, %arg1 : i32, i32
  }
  func.func @transform_3(%arg0: i32, %arg1: i32) -> (i32, i32) {
    %c0_i32 = arith.constant 0 : i32
    return %arg0, %arg1 : i32, i32
  }
}

</mosaic_0001>

<llo_original>
// kernel: tpu_custom_call.1
$region0: #{tpu_custom_call.1}
  #allocation0 [shape = 'u32[]', space=smem, size = 0x4, offset = 0x4, fixed_abs, tag = 'smem constant byte address 0x4 - core index']
  #allocation1 [shape = 'u32[144,128]{1,0:T(1,128)}', space=vmem, size = 0x12000, scoped, tag = 'internal scratch']
  %s0 = inlined_call_operand.hbm [shape: bf16[128,128], index: 0, kind: input, shape index: {}]
  %s1 = inlined_call_operand.hbm [shape: bf16[128,128], index: 1, kind: input, shape index: {}]
  %s2 = inlined_call_operand.vmem [shape: f32[1,128], index: 2, kind: input, shape index: {}]
  %s3 = inlined_call_operand.hbm [shape: bf16[128,128], index: 3, kind: output, shape index: {}]
  %s4 = sld [smem:[#allocation0]]
  $region30: #{tpu_custom_call.1} parent=0
    _
  %s6 = ssub.s32 1, %s4
  %s7 = scalar_select 0, %s6, %s4
  $region1: #{tpu_custom_call.1} parent=0
    #allocation2 [shape = 'u8[32768]{0}', space=vmem, size = 0x8000, scoped, tag = 'input window, operand 0, single buffered']
    #allocation3 [shape = 's32[1]{0}', space=sflag, size = 0x4, scoped, tag = 'scoped memory for tpu_custom_call.1']
    #allocation4 [shape = 's32[1]{0}', space=sflag, size = 0x4, scoped, tag = 'scoped memory for tpu_custom_call.1']
    #allocation5 [shape = 'u8[32768]{0}', space=vmem, size = 0x8000, scoped, tag = 'input window, operand 1, single buffered']
    #allocation6 [shape = 's32[1]{0}', space=sflag, size = 0x4, scoped, tag = 'scoped memory for tpu_custom_call.1']
    #allocation7 [shape = 'u8[32768]{0}', space=vmem, size = 0x8000, scoped, tag = 'output window, operand 0, single buffered']
    %8 = vsyncpa [#allocation3], 0
    %9 = vsyncpa [#allocation6], 0
    %10 = vsyncpa [#allocation4], 0
    // Predicated region
    $region2: #{tpu_custom_call.1} parent=1 // pred_check
      _
    $region3: #{tpu_custom_call.1} parent=1 // pred_check_branch
      %12 = sbr.rel (0) target = $region5
    $region4: #{tpu_custom_call.1} parent=1 // pred_region
      %s14 = ssub.s32 1024, 1024
      %15 = vsyncadd [#allocation3], %s14
      %s16 = sshll.u32 [#allocation2], 4
      %s17 = int_to_ptr.vmem [resolvable:$true] %s16
      %22 = dma.hbm_to_vmem [thread:$0]  %s0, 1024, %s17, [#allocation3], 64, 64, 4
    $region5: #{tpu_custom_call.1} parent=1 // pred_fallthru
      _
    // Predicated region
    $region6: #{tpu_custom_call.1} parent=1 // pred_check
      _
    $region7: #{tpu_custom_call.1} parent=1 // pred_check_branch
      %24 = sbr.rel (0) target = $region9
    $region8: #{tpu_custom_call.1} parent=1 // pred_region
      %s26 = ssub.s32 1024, 1024
      %27 = vsyncadd [#allocation6], %s26
      %s28 = sshll.u32 [#allocation5], 4
      %s29 = int_to_ptr.vmem [resolvable:$true] %s28
      %34 = dma.hbm_to_vmem [thread:$0]  %s1, 1024, %s29, [#allocation6], 64, 64, 4
    $region9: #{tpu_custom_call.1} parent=1 // pred_fallthru
      _
    // Predicated region
    $region10: #{tpu_custom_call.1} parent=1 // pred_check
      _
    $region11: #{tpu_custom_call.1} parent=1 // pred_check_branch
      %36 = sbr.rel (0) target = $region13
    $region12: #{tpu_custom_call.1} parent=1 // pred_region
      _
    $region13: #{tpu_custom_call.1} parent=1 // pred_fallthru
      _
    // Predicated region
    $region14: #{tpu_custom_call.1} parent=1 // pred_check
      _
    $region15: #{tpu_custom_call.1} parent=1 // pred_check_branch
      %38 = sbr.rel (0) target = $region17
    $region16: #{tpu_custom_call.1} parent=1 // pred_region
      %39 = dma.done [#allocation3], 1024
    $region17: #{tpu_custom_call.1} parent=1 // pred_fallthru
      _
    // Predicated region
    $region18: #{tpu_custom_call.1} parent=1 // pred_check
      _
    $region19: #{tpu_custom_call.1} parent=1 // pred_check_branch
      %41 = sbr.rel (0) target = $region21
    $region20: #{tpu_custom_call.1} parent=1 // pred_region
      %42 = dma.done [#allocation6], 1024
    $region21: #{tpu_custom_call.1} parent=1 // pred_fallthru
      _
    %v44 = vld [vmem:[#allocation2] sm:$0xf]
    %v45 = vld [vmem:[#allocation2 + $0x4] sm:$0xf]
    %v46 = vld [vmem:[#allocation2 + $0x8] sm:$0xf]
    %v47 = vld [vmem:[#allocation2 + $0xc] sm:$0xf]
    %v48 = vld [vmem:[#allocation2 + $0x10] sm:$0xf]
    %v49 = vld [vmem:[#allocation2 + $0x14] sm:$0xf]
    %v50 = vld [vmem:[#allocation2 + $0x18] sm:$0xf]
    %v51 = vld [vmem:[#allocation2 + $0x1c] sm:$0xf]
    %v52 = vld [vmem:[#allocation2 + $0x20] sm:$0xf]
    %v53 = vld [vmem:[#allocation2 + $0x24] sm:$0xf]
    %v54 = vld [vmem:[#allocation2 + $0x28] sm:$0xf]
    %v55 = vld [vmem:[#allocation2 + $0x2c] sm:$0xf]
    %v56 = vld [vmem:[#allocation2 + $0x30] sm:$0xf]
    %v57 = vld [vmem:[#allocation2 + $0x34] sm:$0xf]
    %v58 = vld [vmem:[#allocation2 + $0x38] sm:$0xf]
    %v59 = vld [vmem:[#allocation2 + $0x3c] sm:$0xf]
    %v60 = vld [vmem:[#allocation5] sm:$0xf]
    %v61 = vld [vmem:[#allocation5 + $0x4] sm:$0xf]
    %v62 = vld [vmem:[#allocation5 + $0x8] sm:$0xf]
    %v63 = vld [vmem:[#allocation5 + $0xc] sm:$0xf]
    %v64 = vld [vmem:[#allocation5 + $0x10] sm:$0xf]
    %v65 = vld [vmem:[#allocation5 + $0x14] sm:$0xf]
    %v66 = vld [vmem:[#allocation5 + $0x18] sm:$0xf]
    %v67 = vld [vmem:[#allocation5 + $0x1c] sm:$0xf]
    %v68 = vld [vmem:[#allocation5 + $0x20] sm:$0xf]
    %v69 = vld [vmem:[#allocation5 + $0x24] sm:$0xf]
    %v70 = vld [vmem:[#allocation5 + $0x28] sm:$0xf]
    %v71 = vld [vmem:[#allocation5 + $0x2c] sm:$0xf]
    %v72 = vld [vmem:[#allocation5 + $0x30] sm:$0xf]
    %v73 = vld [vmem:[#allocation5 + $0x34] sm:$0xf]
    %v74 = vld [vmem:[#allocation5 + $0x38] sm:$0xf]
    %v75 = vld [vmem:[#allocation5 + $0x3c] sm:$0xf]
    %v76 = vld [vmem:[%s2] sm:$0x1]
    %v78 = vlaneseq
    %v79 = vshrl.u32 %v78, 7
    %v80 = vsub.s32 0, %v79
    %v81 = vrot.slane %v76, %v80
    %v99 = vunpack.c.l.b16 %v44
    %v100 = vunpack.c.l.b16 %v45
    %v101 = vunpack.c.l.b16 %v46
    %v102 = vunpack.c.l.b16 %v47
    %v103 = vunpack.c.l.b16 %v48
    %v104 = vunpack.c.l.b16 %v49
    %v105 = vunpack.c.l.b16 %v50
    %v106 = vunpack.c.l.b16 %v51
    %v107 = vunpack.c.l.b16 %v52
    %v108 = vunpack.c.l.b16 %v53
    %v109 = vunpack.c.l.b16 %v54
    %v110 = vunpack.c.l.b16 %v55
    %v111 = vunpack.c.l.b16 %v56
    %v112 = vunpack.c.l.b16 %v57
    %v113 = vunpack.c.l.b16 %v58
    %v114 = vunpack.c.l.b16 %v59
    %v115 = vpack.c.b16 %v100, %v99
    %v116 = vpack.c.b16 %v102, %v101
    %v117 = vpack.c.b16 %v104, %v103
    %v118 = vpack.c.b16 %v106, %v105
    %v119 = vpack.c.b16 %v108, %v107
    %v120 = vpack.c.b16 %v110, %v109
    %v121 = vpack.c.b16 %v112, %v111
    %v122 = vpack.c.b16 %v114, %v113
    %v147 = vunpack.c.l.b16 %v60
    %v148 = vunpack.c.l.b16 %v61
    %v149 = vunpack.c.l.b16 %v62
    %v150 = vunpack.c.l.b16 %v63
    %v151 = vunpack.c.l.b16 %v64
    %v152 = vunpack.c.l.b16 %v65
    %v153 = vunpack.c.l.b16 %v66
    %v154 = vunpack.c.l.b16 %v67
    %v155 = vunpack.c.l.b16 %v68
    %v156 = vunpack.c.l.b16 %v69
    %v157 = vunpack.c.l.b16 %v70
    %v158 = vunpack.c.l.b16 %v71
    %v159 = vunpack.c.l.b16 %v72
    %v160 = vunpack.c.l.b16 %v73
    %v161 = vunpack.c.l.b16 %v74
    %v162 = vunpack.c.l.b16 %v75
    %v163 = vpack.c.b16 %v148, %v147
    %v164 = vpack.c.b16 %v150, %v149
    %v165 = vpack.c.b16 %v152, %v151
    %v166 = vpack.c.b16 %v154, %v153
    %v167 = vpack.c.b16 %v156, %v155
    %v168 = vpack.c.b16 %v158, %v157
    %v169 = vpack.c.b16 %v160, %v159
    %v170 = vpack.c.b16 %v162, %v161
    %179 = vmatprep.subr.bf16.mxu0 0
    %180 = vmatpush1.bf16.msra.mxu0 %v170
    %181 = vmatprep.subr.bf16.mxu0 0
    %182 = vmatpush1.bf16.msra.mxu0 %v169
    %183 = vmatprep.subr.bf16.mxu0 0
    %184 = vmatpush1.bf16.msra.mxu0 %v168
    %185 = vmatprep.subr.bf16.mxu0 0
    %186 = vmatpush1.bf16.msra.mxu0 %v167
    %187 = vmatprep.subr.bf16.mxu0 0
    %188 = vmatpush1.bf16.msra.mxu0 %v166
    %189 = vmatprep.subr.bf16.mxu0 0
    %190 = vmatpush1.bf16.msra.mxu0 %v165
    %191 = vmatprep.subr.bf16.mxu0 0
    %192 = vmatpush1.bf16.msra.mxu0 %v164
    %193 = vmatprep.subr.bf16.mxu0 0
    %194 = vmatpush1.bf16.msra.mxu0 %v163
    %195 = vmatprep.subr.bf16.mxu0 0
    %196 = vmatpush2.bf16.msra.mxu0 0
    %197 = vmatprep.subr.bf16.mxu0 0
    %198 = vmatpush2.bf16.msra.mxu0 0
    %199 = vmatprep.subr.bf16.mxu0 0
    %200 = vmatpush2.bf16.msra.mxu0 0
    %201 = vmatprep.subr.bf16.mxu0 0
    %202 = vmatpush2.bf16.msra.mxu0 0
    %203 = vmatprep.subr.bf16.mxu0 0
    %204 = vmatpush2.bf16.msra.mxu0 0
    %205 = vmatprep.subr.bf16.mxu0 0
    %206 = vmatpush2.bf16.msra.mxu0 0
    %207 = vmatprep.subr.bf16.mxu0 0
    %208 = vmatpush2.bf16.msra.mxu0 0
    %209 = vmatprep.subr.bf16.mxu0 0
    %210 = vmatpush2.bf16.msra.mxu0 0
    %211 = vmatprep.mubr.bf16.mxu0 0
    %212 = vmatmul.mubr.bf16.gmra.mxu0 %v115
    %v213 = vpop.f32.mrf.mxu0
    %v214 = vadd.f32 %v81, %v213
    %v215 = vpop.f32.mrf.mxu0
    %v216 = vpop.f32.mrf.mxu0
    %v217 = vadd.f32 %v81, %v216
    %v218 = vpop.f32.mrf.mxu0
    %219 = vmatprep.mubr.bf16.mxu0 0
    %220 = vmatmul.mubr.bf16.gmra.mxu0 %v116
    %v221 = vpop.f32.mrf.mxu0
    %v222 = vadd.f32 %v81, %v221
    %v223 = vpop.f32.mrf.mxu0
    %v224 = vpop.f32.mrf.mxu0
    %v225 = vadd.f32 %v81, %v224
    %v226 = vpop.f32.mrf.mxu0
    %227 = vmatprep.mubr.bf16.mxu0 0
    %228 = vmatmul.mubr.bf16.gmra.mxu0 %v117
    %v229 = vpop.f32.mrf.mxu0
    %v230 = vadd.f32 %v81, %v229
    %v231 = vpop.f32.mrf.mxu0
    %v232 = vpop.f32.mrf.mxu0
    %v233 = vadd.f32 %v81, %v232
    %v234 = vpop.f32.mrf.mxu0
    %235 = vmatprep.mubr.bf16.mxu0 0
    %236 = vmatmul.mubr.bf16.gmra.mxu0 %v118
    %v237 = vpop.f32.mrf.mxu0
    %v238 = vadd.f32 %v81, %v237
    %v239 = vpop.f32.mrf.mxu0
    %v240 = vpop.f32.mrf.mxu0
    %v241 = vadd.f32 %v81, %v240
    %v242 = vpop.f32.mrf.mxu0
    %243 = vmatprep.mubr.bf16.mxu0 0
    %244 = vmatmul.mubr.bf16.gmra.mxu0 %v119
    %v245 = vpop.f32.mrf.mxu0
    %v246 = vadd.f32 %v81, %v245
    %v247 = vpop.f32.mrf.mxu0
    %v248 = vpop.f32.mrf.mxu0
    %v249 = vadd.f32 %v81, %v248
    %v250 = vpop.f32.mrf.mxu0
    %251 = vmatprep.mubr.bf16.mxu0 0
    %252 = vmatmul.mubr.bf16.gmra.mxu0 %v120
    %v253 = vpop.f32.mrf.mxu0
    %v254 = vadd.f32 %v81, %v253
    %v255 = vpop.f32.mrf.mxu0
    %v256 = vpop.f32.mrf.mxu0
    %v257 = vadd.f32 %v81, %v256
    %v258 = vpop.f32.mrf.mxu0
    %259 = vmatprep.mubr.bf16.mxu0 0
    %260 = vmatmul.mubr.bf16.gmra.mxu0 %v121
    %v261 = vpop.f32.mrf.mxu0
    %v262 = vadd.f32 %v81, %v261
    %v263 = vpop.f32.mrf.mxu0
    %v264 = vpop.f32.mrf.mxu0
    %v265 = vadd.f32 %v81, %v264
    %v266 = vpop.f32.mrf.mxu0
    %267 = vmatprep.mubr.bf16.mxu0 0
    %268 = vmatmul.mubr.bf16.gmra.mxu0 %v122
    %v269 = vpop.f32.mrf.mxu0
    %v270 = vadd.f32 %v81, %v269
    %v271 = vpop.f32.mrf.mxu0
    %v272 = vpop.f32.mrf.mxu0
    %v273 = vadd.f32 %v81, %v272
    %v274 = vpop.f32.mrf.mxu0
    %275 = vdwg.mxu0
    %v276 = vpack.c.bf16 %v217, %v214
    %v277 = vpack.c.bf16 %v225, %v222
    %v278 = vpack.c.bf16 %v233, %v230
    %v279 = vpack.c.bf16 %v241, %v238
    %v280 = vpack.c.bf16 %v249, %v246
    %v281 = vpack.c.bf16 %v257, %v254
    %v282 = vpack.c.bf16 %v265, %v262
    %v283 = vpack.c.bf16 %v273, %v270
    %v292 = vunpack.c.l.b16 %v276
    %v293 = vunpack.c.h.b16 %v276
    %v294 = vunpack.c.l.b16 %v277
    %v295 = vunpack.c.h.b16 %v277
    %v296 = vunpack.c.l.b16 %v278
    %v297 = vunpack.c.h.b16 %v278
    %v298 = vunpack.c.l.b16 %v279
    %v299 = vunpack.c.h.b16 %v279
    %v300 = vunpack.c.l.b16 %v280
    %v301 = vunpack.c.h.b16 %v280
    %v302 = vunpack.c.l.b16 %v281
    %v303 = vunpack.c.h.b16 %v281
    %v304 = vunpack.c.l.b16 %v282
    %v305 = vunpack.c.h.b16 %v282
    %v306 = vunpack.c.l.b16 %v283
    %v307 = vunpack.c.h.b16 %v283
    %v308 = vpack.c.b16 %v292, %v292
    %v309 = vpack.c.b16 %v293, %v293
    %v310 = vpack.c.b16 %v294, %v294
    %v311 = vpack.c.b16 %v295, %v295
    %v312 = vpack.c.b16 %v296, %v296
    %v313 = vpack.c.b16 %v297, %v297
    %v314 = vpack.c.b16 %v298, %v298
    %v315 = vpack.c.b16 %v299, %v299
    %v316 = vpack.c.b16 %v300, %v300
    %v317 = vpack.c.b16 %v301, %v301
    %v318 = vpack.c.b16 %v302, %v302
    %v319 = vpack.c.b16 %v303, %v303
    %v320 = vpack.c.b16 %v304, %v304
    %v321 = vpack.c.b16 %v305, %v305
    %v322 = vpack.c.b16 %v306, %v306
    %v323 = vpack.c.b16 %v307, %v307
    %340 = vst [vmem:[#allocation7] sm:$0xf] %v308
    %341 = vst [vmem:[#allocation7 + $0x4] sm:$0xf] %v309
    %342 = vst [vmem:[#allocation7 + $0x8] sm:$0xf] %v310
    %343 = vst [vmem:[#allocation7 + $0xc] sm:$0xf] %v311
    %344 = vst [vmem:[#allocation7 + $0x10] sm:$0xf] %v312
    %345 = vst [vmem:[#allocation7 + $0x14] sm:$0xf] %v313
    %346 = vst [vmem:[#allocation7 + $0x18] sm:$0xf] %v314
    %347 = vst [vmem:[#allocation7 + $0x1c] sm:$0xf] %v315
    %348 = vst [vmem:[#allocation7 + $0x20] sm:$0xf] %v316
    %349 = vst [vmem:[#allocation7 + $0x24] sm:$0xf] %v317
    %350 = vst [vmem:[#allocation7 + $0x28] sm:$0xf] %v318
    %351 = vst [vmem:[#allocation7 + $0x2c] sm:$0xf] %v319
    %352 = vst [vmem:[#allocation7 + $0x30] sm:$0xf] %v320
    %353 = vst [vmem:[#allocation7 + $0x34] sm:$0xf] %v321
    %354 = vst [vmem:[#allocation7 + $0x38] sm:$0xf] %v322
    %355 = vst [vmem:[#allocation7 + $0x3c] sm:$0xf] %v323
    // Predicated region
    $region22: #{tpu_custom_call.1} parent=1 // pred_check
      _
    $region23: #{tpu_custom_call.1} parent=1 // pred_check_branch
      %357 = sbr.rel (0) target = $region25
    $region24: #{tpu_custom_call.1} parent=1 // pred_region
      %s359 = ssub.s32 1024, 1024
      %360 = vsyncadd [#allocation4], %s359
      %s361 = sshll.u32 [#allocation7], 4
      %s362 = int_to_ptr.vmem [resolvable:$true] %s361
      %367 = dma.vmem_to_hbm [thread:$0]  %s362, 1024, %s3, [#allocation4], 64, 64, 4
    $region25: #{tpu_custom_call.1} parent=1 // pred_fallthru
      _
    // Predicated region
    $region26: #{tpu_custom_call.1} parent=1 // pred_check
      _
    $region27: #{tpu_custom_call.1} parent=1 // pred_check_branch
      %369 = sbr.rel (0) target = $region29
    $region28: #{tpu_custom_call.1} parent=1 // pred_region
      %370 = dma.done [#allocation4], 1024
    $region29: #{tpu_custom_call.1} parent=1 // pred_fallthru
      _
    %371 = vsyncpa [#allocation3], 1
    %372 = vsyncpa [#allocation6], 1
    %373 = vsyncpa [#allocation4], 1

</llo_original>
